<compile_context>
chip_gen: v7x
topology: tpu7x:2x2x1
jax: 0.10.0
libtpu: 0.0.40
codegen_flags: <defaults>
</compile_context>

<pallas_src>
import jax
import jax.numpy as jnp
from jax import lax
from jax.experimental import pallas as pl
from jax.experimental.pallas import tpu as pltpu

BN_EPS = 1e-5


# ----------------------------------------------------------------------------
# Kernels
# ----------------------------------------------------------------------------
def partial_kernel(cls1_ref, cls2_ref, w1_ref, bn1_ref, w2_ref, part_ref):
    """Grid (p, j): p = parallel split (megacore), j = inner_dim column block.

    Computes layer1 + ReLU + BN1 for this column block and accumulates the
    layer2 partial product (over this K block) into the resident f32 output
    slab of split p.
    """
    j = pl.program_id(1)

    @pl.when(j == 0)
    def _init():
        part_ref[...] = jnp.zeros_like(part_ref)

    # layer1: split matmul over the two CLS halves (bf16 MXU, f32 accumulate).
    bn1 = bn1_ref[...]                       # (3, tile_n): [b1, gamma1, beta1]
    h1 = (jnp.dot(cls1_ref[...], w1_ref[0], preferred_element_type=jnp.float32)
          + jnp.dot(cls2_ref[...], w1_ref[1], preferred_element_type=jnp.float32)
          + bn1[0:1, :])
    h1 = jnp.maximum(h1, 0.0)

    # BatchNorm1d #1 (batch statistics; per-feature => column-block local).
    # Two-pass centered variance (cheap; avoids cancellation).
    inv_bs = 1.0 / h1.shape[0]
    mu = jnp.sum(h1, axis=0, keepdims=True) * inv_bs
    d = h1 - mu
    var = jnp.sum(d * d, axis=0, keepdims=True) * inv_bs
    h1 = d * (bn1[1:2, :] * lax.rsqrt(var + BN_EPS)) + bn1[2:3, :]

    # layer2 partial product for this K block, accumulated in f32 in the
    # resident output block (one partial slab per parallel split).
    part_ref[...] += jnp.dot(h1.astype(jnp.bfloat16), w2_ref[...],
                             preferred_element_type=jnp.float32)


def epilogue_kernel(part_ref, pack2_ref, bp_ref, o_ref):
    """Sum partials over splits, then b2 + ReLU + BN2 + (dropout=id) + proj."""
    p2 = pack2_ref[...]                      # (4, D): [b2, gamma2, beta2, wp]
    h2 = jnp.sum(part_ref[...], axis=0) + p2[0:1, :]
    h2 = jnp.maximum(h2, 0.0)

    inv_bs = 1.0 / h2.shape[0]
    mu = jnp.sum(h2, axis=0, keepdims=True) * inv_bs
    d = h2 - mu
    var = jnp.sum(d * d, axis=0, keepdims=True) * inv_bs
    h2 = d * (p2[1:2, :] * lax.rsqrt(var + BN_EPS)) + p2[2:3, :]

    # dropout: identity (eval / deterministic).
    # Projection (output width 1): VPU multiply + lane reduction.
    out = jnp.sum(h2 * p2[3:4, :], axis=-1, keepdims=True) + bp_ref[...]
    o_ref[...] = out.astype(o_ref.dtype)


# ----------------------------------------------------------------------------
# Generation-aware sizing
# ----------------------------------------------------------------------------
def _vmem_capacity_bytes():
    try:
        info = pltpu.get_tpu_info()
        cap = getattr(info, "vmem_capacity_bytes", None)
        if cap:
            return int(cap)
    except Exception:
        pass
    return 64 << 20  # conservative fallback (v7x per-core VMEM)


def _pick_tile_n(dp, hidden, bs, vmem_capacity):
    """Largest 128-multiple divisor of dp whose double-buffered working set
    fits the budget; dominant term is the w2 tile (tile_n x dp bf16)."""
    if dp % 128 != 0:            # only tiny (<=128) unpadded dims reach here
        return dp
    budget = int(vmem_capacity * 0.55)
    bs8 = max(8, ((bs + 7) // 8) * 8)
    resident = 2 * (2 * bs8 * hidden * 2) + 2 * bs8 * dp * 4
    best, t = 128, 128
    while t <= dp:
        if dp % t == 0:
            per_step = 2 * (2 * hidden * t * 2    # w1 tile (bf16, 2 bufs)
                            + 8 * t * 4           # bn1 pack (sublane-padded)
                            + t * dp * 2)         # w2 tile (bf16)
            if resident + per_step <= budget:
                best = t
        t += 128
    return best


def _vmem_limit_bytes(bs, hidden, dp, tile_n, vmem_capacity):
    bs8 = max(8, ((bs + 7) // 8) * 8)
    per_step = 2 * (2 * hidden * tile_n * 2 + 8 * tile_n * 4 + tile_n * dp * 2)
    resident = 2 * (2 * bs8 * hidden * 2) + 2 * bs8 * dp * 4 + bs8 * 128 * 4
    est = int((per_step + resident) * 1.25) + (8 << 20)
    cap = int(vmem_capacity) * 3 // 4
    return int(max(min(est, cap), 16 << 20))


# ----------------------------------------------------------------------------
# Parameter init / one-time packing
# ----------------------------------------------------------------------------
def init_params(key, input_dim, inner_dim):
    """Deterministic synthetic parameter init (torch-Linear-like uniform)."""
    ks = jax.random.split(key, 6)

    def lin(kw, kb, fan_in, shape_w, shape_b):
        bound = 1.0 / jnp.sqrt(fan_in)
        w = jax.random.uniform(kw, shape_w, jnp.float32, -bound, bound)
        b = jax.random.uniform(kb, shape_b, jnp.float32, -bound, bound)
        return w, b

    w1, b1 = lin(ks[0], ks[1], input_dim, (input_dim, inner_dim), (1, inner_dim))
    w2, b2 = lin(ks[2], ks[3], inner_dim, (inner_dim, inner_dim), (1, inner_dim))
    wp, bp = lin(ks[4], ks[5], inner_dim, (1, inner_dim), (1, 1))

    return {
        "w1t": w1, "b1": b1,
        "gamma1": jnp.ones((1, inner_dim), jnp.float32),
        "beta1": jnp.zeros((1, inner_dim), jnp.float32),
        "w2t": w2, "b2": b2,
        "gamma2": jnp.ones((1, inner_dim), jnp.float32),
        "beta2": jnp.zeros((1, inner_dim), jnp.float32),
        "wp": wp, "bp": bp,
    }


def prepare_params(params):
    """One-time packing for inference: bf16 weights (w1 pre-split), packed BN
    vectors, and inner_dim zero-padded to a multiple of 128.

    Zero padding is exact: padded layer1 columns are 0 after ReLU, BN maps
    them to 0 (gamma=beta=0), padded w2 rows/cols and wp entries are 0, so the
    output is bit-for-bit the same function of the real features."""
    input_dim, inner_dim = params["w1t"].shape
    hidden = input_dim // 2
    if inner_dim > 128 and inner_dim % 128 != 0:
        dp = ((inner_dim + 127) // 128) * 128
    else:
        dp = inner_dim
    pad = dp - inner_dim

    w1 = params["w1t"]
    w2 = params["w2t"]
    if pad:
        w1 = jnp.pad(w1, ((0, 0), (0, pad)))
        w2 = jnp.pad(w2, ((0, pad), (0, pad)))
    w1 = w1.reshape(2, hidden, dp).astype(jnp.bfloat16)   # [cls1-half, cls2-half]
    w2 = w2.astype(jnp.bfloat16)

    def padv(v):
        return jnp.pad(v, ((0, 0), (0, pad))) if pad else v

    bn1_pack = jnp.concatenate(
        [padv(params["b1"]), padv(params["gamma1"]), padv(params["beta1"])],
        axis=0).astype(jnp.float32)                        # (3, dp)
    pack2 = jnp.concatenate(
        [padv(params["b2"]), padv(params["gamma2"]), padv(params["beta2"]),
         padv(params["wp"])], axis=0).astype(jnp.float32)  # (4, dp)

    return {"w1_bf16": w1, "w2_bf16": w2, "bn1_pack": bn1_pack,
            "pack2": pack2, "bp": params["bp"].astype(jnp.float32),
            "hidden": hidden, "inner_dim": inner_dim, "inner_dim_padded": dp}


# ----------------------------------------------------------------------------
# Forward
# ----------------------------------------------------------------------------
def two_sentence_classification_head(feature, second_cls_idx, prep,
                                     tile_n=None, num_splits=None):
    """feature: [bs, seq, hidden] f32; second_cls_idx: (batch_idx[bs], seq_idx[bs])."""
    bs, _, hidden = feature.shape
    assert hidden == prep["hidden"]
    dp = prep["inner_dim_padded"]

    # Only two small row gathers; the [bs, 2*hidden] concat never hits HBM —
    # the first matmul is split across the two stacked halves of W1 in-kernel.
    cls1 = feature[:, 0, :].astype(jnp.bfloat16)
    cls2 = feature[second_cls_idx[0], second_cls_idx[1]].astype(jnp.bfloat16)

    vmem_cap = _vmem_capacity_bytes()
    if tile_n is None:
        tile_n = _pick_tile_n(dp, hidden, bs, vmem_cap)
    assert dp % tile_n == 0 and (tile_n % 128 == 0 or tile_n == dp)
    n_blocks = dp // tile_n
    if num_splits is None:
        # leading "parallel" axis: shards weight streaming across the 2 TCs
        # on v7x; harmless (pure iteration) on single-TC v5e/v6e.
        num_splits = 2 if (n_blocks >= 2 and n_blocks % 2 == 0) else 1
    assert n_blocks % num_splits == 0
    blocks_per_split = n_blocks // num_splits

    def col(p, j):
        return p * blocks_per_split + j

    in_specs = [
        pl.BlockSpec((bs, hidden), lambda p, j: (0, 0)),                 # cls1 (bf16)
        pl.BlockSpec((bs, hidden), lambda p, j: (0, 0)),                 # cls2 (bf16)
        pl.BlockSpec((2, hidden, tile_n), lambda p, j: (0, 0, col(p, j))),  # w1 stack
        pl.BlockSpec((3, tile_n), lambda p, j: (0, col(p, j))),          # b1/g1/be1
        pl.BlockSpec((tile_n, dp), lambda p, j: (col(p, j), 0)),         # w2 K-tile
    ]
    out_specs = pl.BlockSpec((None, bs, dp), lambda p, j: (p, 0, 0))     # partials

    flops = 2 * bs * dp * (2 * hidden + dp) + 8 * bs * dp
    bytes_accessed = (2 * (2 * hidden * dp + dp * dp)        # bf16 weights
                      + 4 * 7 * dp + 4                       # packed f32 vectors
                      + 2 * bs * 2 * hidden                  # bf16 cls
                      + 4 * num_splits * bs * dp + 4 * bs)   # partials + output
    cost = pl.CostEstimate(flops=int(flops), transcendentals=int(2 * dp),
                           bytes_accessed=int(bytes_accessed))

    partial = pl.pallas_call(
        partial_kernel,
        out_shape=jax.ShapeDtypeStruct((num_splits, bs, dp), jnp.float32),
        grid_spec=pltpu.PrefetchScalarGridSpec(
            num_scalar_prefetch=0,
            grid=(num_splits, blocks_per_split),
            in_specs=in_specs,
            out_specs=out_specs,
        ),
        compiler_params=pltpu.CompilerParams(
            dimension_semantics=("parallel", "arbitrary"),
            vmem_limit_bytes=_vmem_limit_bytes(bs, hidden, dp, tile_n, vmem_cap),
        ),
        cost_estimate=cost,
    )(cls1, cls2, prep["w1_bf16"], prep["bn1_pack"], prep["w2_bf16"])

    # Tiny epilogue: sum partials + b2 + ReLU + BN2 + projection.
    epi_est = (num_splits * bs * dp + 5 * dp + 8 * bs) * 4 * 3 + (4 << 20)
    epi_vmem = int(max(min(epi_est, vmem_cap * 3 // 4), 16 << 20))
    out = pl.pallas_call(
        epilogue_kernel,
        out_shape=jax.ShapeDtypeStruct((bs, 1), jnp.float32),
        compiler_params=pltpu.CompilerParams(vmem_limit_bytes=epi_vmem),
    )(partial, prep["pack2"], prep["bp"])
    return out


# ----------------------------------------------------------------------------
# References
# ----------------------------------------------------------------------------
def _bn_train(h, gamma, beta):
    mu = h.mean(0, keepdims=True)
    d = h - mu
    var = (d * d).mean(0, keepdims=True)
    return d * (gamma * lax.rsqrt(var + BN_EPS)) + beta


def reference_forward_matched(feature, second_cls_idx, prep):
    """Plain-JAX reference with the kernel's exact precision policy."""
    cls1 = feature[:, 0, :].astype(jnp.bfloat16)
    cls2 = feature[second_cls_idx[0], second_cls_idx[1]].astype(jnp.bfloat16)
    w1, w2 = prep["w1_bf16"], prep["w2_bf16"]
    bn1, p2 = prep["bn1_pack"], prep["pack2"]
    h = (jnp.dot(cls1, w1[0], preferred_element_type=jnp.float32)
         + jnp.dot(cls2, w1[1], preferred_element_type=jnp.float32) + bn1[0:1])
    h = jnp.maximum(h, 0.0)
    h = _bn_train(h, bn1[1:2], bn1[2:3])
    h = jnp.dot(h.astype(jnp.bfloat16), w2,
                preferred_element_type=jnp.float32) + p2[0:1]
    h = jnp.maximum(h, 0.0)
    h = _bn_train(h, p2[1:2], p2[2:3])
    return jnp.sum(h * p2[3:4], axis=-1, keepdims=True) + prep["bp"]


def reference_forward_f32(feature, second_cls_idx, params):
    """Pure-f32 reference matching the PyTorch module's forward semantics."""
    cls1 = feature[:, 0, :]
    cls2 = feature[second_cls_idx[0], second_cls_idx[1]]
    x = jnp.concatenate([cls1, cls2], axis=-1).astype(jnp.float32)
    h = x @ params["w1t"] + params["b1"]
    h = jnp.maximum(h, 0.0)
    mu = h.mean(0, keepdims=True)
    var = ((h - mu) ** 2).mean(0, keepdims=True)
    h = (h - mu) / jnp.sqrt(var + BN_EPS) * params["gamma1"] + params["beta1"]
    h = h @ params["w2t"] + params["b2"]
    h = jnp.maximum(h, 0.0)
    mu = h.mean(0, keepdims=True)
    var = ((h - mu) ** 2).mean(0, keepdims=True)
    h = (h - mu) / jnp.sqrt(var + BN_EPS) * params["gamma2"] + params["beta2"]
    return h @ params["wp"].T + params["bp"]


# ----------------------------------------------------------------------------
# Demo / checks
# ----------------------------------------------------------------------------
if __name__ == "__main__":
    root = jax.random.PRNGKey(0)

    def run_case(key, bs, seq, hidden, tile_n=None, num_splits=None):
        k_feat, k_idx, k_par = jax.random.split(key, 3)
        inner_dim = hidden
        feature = jax.random.normal(k_feat, (bs, seq, hidden), jnp.float32)
        second_cls_idx = (jnp.arange(bs, dtype=jnp.int32),
                          jax.random.randint(k_idx, (bs,), 1, seq, dtype=jnp.int32))
        params = init_params(k_par, 2 * hidden, inner_dim)
        prep = prepare_params(params)

        out = two_sentence_classification_head(feature, second_cls_idx, prep,
                                                tile_n=tile_n,
                                                num_splits=num_splits)
        out = jax.block_until_ready(out)

        ref_m = reference_forward_matched(feature, second_cls_idx, prep)
        ref_f = reference_forward_f32(feature, second_cls_idx, params)

        assert out.shape == (bs, 1), out.shape
        assert bool(jnp.all(jnp.isfinite(out)))
        # Tight check vs. a JAX reference with the identical precision policy.
        assert jnp.allclose(out, ref_m, atol=5e-3, rtol=5e-3), (out, ref_m)
        # Loose sanity vs. full-f32 module semantics (bf16 MXU + batch-stat BN
        # makes bit-level agreement impossible): relative L2 error.
        rel = float(jnp.linalg.norm(out - ref_f) /
                    (jnp.linalg.norm(ref_f) + 1e-12))
        assert rel < 0.2, (rel, out, ref_f)

    keys = jax.random.split(root, 3)
    # 1) small default config (single block, single split)
    run_case(keys[0], bs=8, seq=8, hidden=32)
    # 2) multi-block, parallel (megacore) split of the K reduction
    run_case(keys[1], bs=16, seq=4, hidden=256, tile_n=128, num_splits=2)
    # 3) non-128-multiple inner_dim (padding path) + K accumulation over j
    run_case(keys[2], bs=8, seq=4, hidden=160, tile_n=128, num_splits=1)

    print("KERNEL_OK")
</pallas_src>

<mosaic_0001>
module attributes {stable_mosaic.version = 11 : i64} {
  func.func @partial_kernel(%arg0: i32, %arg1: i32, %arg2: memref<8x32xbf16, #tpu.memory_space<vmem>>, %arg3: memref<8x32xbf16, #tpu.memory_space<vmem>>, %arg4: memref<2x32x32xbf16, #tpu.memory_space<vmem>>, %arg5: memref<3x32xf32, #tpu.memory_space<vmem>>, %arg6: memref<32x32xbf16, #tpu.memory_space<vmem>>, %arg7: memref<1x8x32xf32, #tpu.memory_space<vmem>>) attributes {dimension_semantics = [#tpu.dimension_semantics<parallel>, #tpu.dimension_semantics<arbitrary>], iteration_bounds = array<i64: 1, 1>, scalar_prefetch = 0 : i64, scratch_operands = 0 : i64, tpu.core_type = #tpu.core_type<tc>, window_params = [{pipeline_mode = #tpu.pipeline_mode<synchronous>, transform_indices = @transform_0, window_bounds = array<i64: 8, 32>}, {pipeline_mode = #tpu.pipeline_mode<synchronous>, transform_indices = @transform_1, window_bounds = array<i64: 8, 32>}, {transform_indices = @transform_2, window_bounds = array<i64: 2, 32, 32>}, {transform_indices = @transform_3, window_bounds = array<i64: 3, 32>}, {transform_indices = @transform_4, window_bounds = array<i64: 32, 32>}, {transform_indices = @transform_5, window_bounds = array<i64: 1, 8, 32>}]} {
    %c0_i32 = arith.constant 0 : i32
    %0 = arith.cmpi eq, %arg1, %c0_i32 : i32
    %1 = arith.extui %0 : i1 to i32
    %c0_i32_0 = arith.constant 0 : i32
    %2 = arith.cmpi ne, %1, %c0_i32_0 : i32
    scf.if %2 {
      %cst_27 = arith.constant 0.000000e+00 : f32
      %48 = vector.broadcast %cst_27 : f32 to vector<8x32xf32>
      %c0_28 = arith.constant 0 : index
      %c0_29 = arith.constant 0 : index
      %c0_30 = arith.constant 0 : index
      %49 = vector.load %arg7[%c0_28, %c0_29, %c0_30] : memref<1x8x32xf32, #tpu.memory_space<vmem>>, vector<1x8x32xf32>
      %50 = vector.shape_cast %49 : vector<1x8x32xf32> to vector<8x32xf32>
      %51 = vector.shape_cast %48 : vector<8x32xf32> to vector<1x8x32xf32>
      tpu.vector_store %arg7[%c0_28, %c0_29, %c0_30], %51 {strides = array<i32>} : memref<1x8x32xf32, #tpu.memory_space<vmem>>, vector<1x8x32xf32>,
    } else {
    }
    %c0 = arith.constant 0 : index
    %c0_1 = arith.constant 0 : index
    %3 = vector.load %arg5[%c0, %c0_1] : memref<3x32xf32, #tpu.memory_space<vmem>>, vector<3x32xf32>
    %c0_2 = arith.constant 0 : index
    %c0_3 = arith.constant 0 : index
    %4 = vector.load %arg2[%c0_2, %c0_3] : memref<8x32xbf16, #tpu.memory_space<vmem>>, vector<8x32xbf16>
    %c0_4 = arith.constant 0 : index
    %c0_5 = arith.constant 0 : index
    %c0_6 = arith.constant 0 : index
    %5 = vector.load %arg4[%c0_4, %c0_5, %c0_6] : memref<2x32x32xbf16, #tpu.memory_space<vmem>>, vector<1x32x32xbf16>
    %6 = vector.shape_cast %5 : vector<1x32x32xbf16> to vector<32x32xbf16>
    %cst = arith.constant dense<0.000000e+00> : vector<8x32xf32>
    %7 = tpu.matmul %4, %6, %cst {dimension_numbers = #tpu.dot_dimension_numbers<[1], [0], [0], [1], [0, 0, 1, 1], [], []>} : vector<8x32xbf16>, vector<32x32xbf16>, vector<8x32xf32> -> vector<8x32xf32>
    %c0_7 = arith.constant 0 : index
    %c0_8 = arith.constant 0 : index
    %8 = vector.load %arg3[%c0_7, %c0_8] : memref<8x32xbf16, #tpu.memory_space<vmem>>, vector<8x32xbf16>
    %c1 = arith.constant 1 : index
    %c0_9 = arith.constant 0 : index
    %c0_10 = arith.constant 0 : index
    %9 = vector.load %arg4[%c1, %c0_9, %c0_10] : memref<2x32x32xbf16, #tpu.memory_space<vmem>>, vector<1x32x32xbf16>
    %10 = vector.shape_cast %9 : vector<1x32x32xbf16> to vector<32x32xbf16>
    %cst_11 = arith.constant dense<0.000000e+00> : vector<8x32xf32>
    %11 = tpu.matmul %8, %10, %cst_11 {dimension_numbers = #tpu.dot_dimension_numbers<[1], [0], [0], [1], [0, 0, 1, 1], [], []>} : vector<8x32xbf16>, vector<32x32xbf16>, vector<8x32xf32> -> vector<8x32xf32>
    %12 = arith.addf %7, %11 : vector<8x32xf32>
    %13 = vector.extract_strided_slice %3 {offsets = [0, 0], sizes = [1, 32], strides = [1, 1]} : vector<3x32xf32> to vector<1x32xf32>
    %14 = vector.broadcast %13 : vector<1x32xf32> to vector<8x32xf32>
    %15 = arith.addf %12, %14 : vector<8x32xf32>
    %cst_12 = arith.constant 0.000000e+00 : f32
    %16 = vector.broadcast %cst_12 : f32 to vector<8x32xf32>
    %17 = arith.maximumf %15, %16 : vector<8x32xf32>
    %cst_13 = arith.constant dense<0.000000e+00> : vector<32xf32>
    %18 = vector.multi_reduction <add>, %17, %cst_13 [0] : vector<8x32xf32> to vector<32xf32>
    %19 = vector.shape_cast %18 : vector<32xf32> to vector<1x32xf32>
    %cst_14 = arith.constant 1.250000e-01 : f32
    %20 = vector.broadcast %cst_14 : f32 to vector<1x32xf32>
    %21 = arith.mulf %19, %20 : vector<1x32xf32>
    %22 = vector.broadcast %21 : vector<1x32xf32> to vector<8x32xf32>
    %23 = arith.subf %17, %22 : vector<8x32xf32>
    %24 = arith.mulf %23, %23 : vector<8x32xf32>
    %cst_15 = arith.constant dense<0.000000e+00> : vector<32xf32>
    %25 = vector.multi_reduction <add>, %24, %cst_15 [0] : vector<8x32xf32> to vector<32xf32>
    %26 = vector.shape_cast %25 : vector<32xf32> to vector<1x32xf32>
    %cst_16 = arith.constant 1.250000e-01 : f32
    %27 = vector.broadcast %cst_16 : f32 to vector<1x32xf32>
    %28 = arith.mulf %26, %27 : vector<1x32xf32>
    %29 = vector.extract_strided_slice %3 {offsets = [1, 0], sizes = [1, 32], strides = [1, 1]} : vector<3x32xf32> to vector<1x32xf32>
    %cst_17 = arith.constant 9.99999974E-6 : f32
    %30 = vector.broadcast %cst_17 : f32 to vector<1x32xf32>
    %31 = arith.addf %28, %30 : vector<1x32xf32>
    %32 = math.rsqrt %31 : vector<1x32xf32>
    %33 = arith.mulf %29, %32 : vector<1x32xf32>
    %34 = vector.broadcast %33 : vector<1x32xf32> to vector<8x32xf32>
    %35 = arith.mulf %23, %34 : vector<8x32xf32>
    %36 = vector.extract_strided_slice %3 {offsets = [2, 0], sizes = [1, 32], strides = [1, 1]} : vector<3x32xf32> to vector<1x32xf32>
    %37 = vector.broadcast %36 : vector<1x32xf32> to vector<8x32xf32>
    %38 = arith.addf %35, %37 : vector<8x32xf32>
    %c0_18 = arith.constant 0 : index
    %c0_19 = arith.constant 0 : index
    %c0_20 = arith.constant 0 : index
    %39 = vector.load %arg7[%c0_18, %c0_19, %c0_20] : memref<1x8x32xf32, #tpu.memory_space<vmem>>, vector<1x8x32xf32>
    %40 = vector.shape_cast %39 : vector<1x8x32xf32> to vector<8x32xf32>
    %41 = arith.truncf %38 : vector<8x32xf32> to vector<8x32xbf16>
    %c0_21 = arith.constant 0 : index
    %c0_22 = arith.constant 0 : index
    %42 = vector.load %arg6[%c0_21, %c0_22] : memref<32x32xbf16, #tpu.memory_space<vmem>>, vector<32x32xbf16>
    %cst_23 = arith.constant dense<0.000000e+00> : vector<8x32xf32>
    %43 = tpu.matmul %41, %42, %cst_23 {dimension_numbers = #tpu.dot_dimension_numbers<[1], [0], [0], [1], [0, 0, 1, 1], [], []>} : vector<8x32xbf16>, vector<32x32xbf16>, vector<8x32xf32> -> vector<8x32xf32>
    %44 = arith.addf %40, %43 : vector<8x32xf32>
    %c0_24 = arith.constant 0 : index
    %c0_25 = arith.constant 0 : index
    %c0_26 = arith.constant 0 : index
    %45 = vector.load %arg7[%c0_24, %c0_25, %c0_26] : memref<1x8x32xf32, #tpu.memory_space<vmem>>, vector<1x8x32xf32>
    %46 = vector.shape_cast %45 : vector<1x8x32xf32> to vector<8x32xf32>
    %47 = vector.shape_cast %44 : vector<8x32xf32> to vector<1x8x32xf32>
    tpu.vector_store %arg7[%c0_24, %c0_25, %c0_26], %47 {strides = array<i32>} : memref<1x8x32xf32, #tpu.memory_space<vmem>>, vector<1x8x32xf32>,
    return
  }
  func.func @transform_0(%arg0: i32, %arg1: i32) -> (i32, i32) {
    %c0_i32 = arith.constant 0 : i32
    %c0_i32_0 = arith.constant 0 : i32
    %c0_i32_1 = arith.constant 0 : i32
    return %c0_i32, %c0_i32_0 : i32, i32
  }
  func.func @transform_1(%arg0: i32, %arg1: i32) -> (i32, i32) {
    %c0_i32 = arith.constant 0 : i32
    %c0_i32_0 = arith.constant 0 : i32
    %c0_i32_1 = arith.constant 0 : i32
    return %c0_i32, %c0_i32_0 : i32, i32
  }
  func.func @transform_2(%arg0: i32, %arg1: i32) -> (i32, i32, i32) {
    %c1_i32 = arith.constant 1 : i32
    %0 = arith.muli %arg0, %c1_i32 : i32
    %1 = arith.addi %0, %arg1 : i32
    %c0_i32 = arith.constant 0 : i32
    %c0_i32_0 = arith.constant 0 : i32
    %c0_i32_1 = arith.constant 0 : i32
    return %c0_i32, %c0_i32_0, %1 : i32, i32, i32
  }
  func.func @transform_3(%arg0: i32, %arg1: i32) -> (i32, i32) {
    %c1_i32 = arith.constant 1 : i32
    %0 = arith.muli %arg0, %c1_i32 : i32
    %1 = arith.addi %0, %arg1 : i32
    %c0_i32 = arith.constant 0 : i32
    %c0_i32_0 = arith.constant 0 : i32
    return %c0_i32, %1 : i32, i32
  }
  func.func @transform_4(%arg0: i32, %arg1: i32) -> (i32, i32) {
    %c1_i32 = arith.constant 1 : i32
    %0 = arith.muli %arg0, %c1_i32 : i32
    %1 = arith.addi %0, %arg1 : i32
    %c0_i32 = arith.constant 0 : i32
    %c0_i32_0 = arith.constant 0 : i32
    return %1, %c0_i32 : i32, i32
  }
  func.func @transform_5(%arg0: i32, %arg1: i32) -> (i32, i32, i32) {
    %c0_i32 = arith.constant 0 : i32
    %c0_i32_0 = arith.constant 0 : i32
    %c0_i32_1 = arith.constant 0 : i32
    return %arg0, %c0_i32, %c0_i32_0 : i32, i32, i32
  }
}

</mosaic_0001>

<llo_original>
// kernel: tpu_custom_call.1
$region0: #{tpu_custom_call.1}
  #allocation0 [shape = 'u32[]', space=smem, size = 0x4, offset = 0x4, fixed_abs, tag = 'smem constant byte address 0x4 - core index']
  #allocation1 [shape = 'u32[144,128]{1,0:T(1,128)}', space=vmem, size = 0x12000, scoped, tag = 'internal scratch']
  %s0 = inlined_call_operand.hbm [shape: bf16[8,32], index: 0, kind: input, shape index: {}]
  %s1 = inlined_call_operand.hbm [shape: bf16[8,32], index: 1, kind: input, shape index: {}]
  %s2 = inlined_call_operand.hbm [shape: bf16[2,32,32], index: 2, kind: input, shape index: {}]
  %s3 = inlined_call_operand.vmem [shape: f32[3,32], index: 3, kind: input, shape index: {}]
  %s4 = inlined_call_operand.hbm [shape: bf16[32,32], index: 4, kind: input, shape index: {}]
  %s5 = inlined_call_operand.hbm [shape: f32[1,8,32], index: 5, kind: output, shape index: {}]
  %s6 = sld [smem:[#allocation0]]
  $region50: #{tpu_custom_call.1} parent=0
    _
  %s8 = ssub.s32 1, %s6
  %s9 = scalar_select 0, %s8, %s6
  $region1: #{tpu_custom_call.1} parent=0
    #allocation2 [shape = 'u8[2048]{0}', space=vmem, size = 0x800, scoped, tag = 'input window, operand 0, single buffered']
    #allocation3 [shape = 's32[1]{0}', space=sflag, size = 0x4, scoped, tag = 'scoped memory for tpu_custom_call.1']
    #allocation4 [shape = 's32[1]{0}', space=sflag, size = 0x4, scoped, tag = 'scoped memory for tpu_custom_call.1']
    #allocation5 [shape = 'u8[2048]{0}', space=vmem, size = 0x800, scoped, tag = 'input window, operand 1, single buffered']
    #allocation6 [shape = 's32[1]{0}', space=sflag, size = 0x4, scoped, tag = 'scoped memory for tpu_custom_call.1']
    #allocation7 [shape = 'u8[16384]{0}', space=vmem, size = 0x4000, scoped, tag = 'input window, operand 2, single buffered']
    #allocation8 [shape = 'u8[8192]{0}', space=vmem, size = 0x2000, scoped, tag = 'input window, operand 4, single buffered']
    #allocation9 [shape = 's32[1]{0}', space=sflag, size = 0x4, scoped, tag = 'scoped memory for tpu_custom_call.1']
    #allocation10 [shape = 'u8[4096]{0}', space=vmem, size = 0x1000, scoped, tag = 'output window, operand 0, single buffered']
    %10 = vsyncpa [#allocation3], 0
    %11 = vsyncpa [#allocation6], 0
    %12 = vsyncpa [#allocation9], 0
    %13 = vsyncpa [#allocation4], 0
    // Predicated region
    $region2: #{tpu_custom_call.1} parent=1 // pred_check
      _
    $region3: #{tpu_custom_call.1} parent=1 // pred_check_branch
      %15 = sbr.rel (0) target = $region5
    $region4: #{tpu_custom_call.1} parent=1 // pred_region
      %s17 = ssub.s32 64, 64
      %18 = vsyncadd [#allocation3], %s17
      %s20 = sshll.u32 [#allocation2], 4
      %s21 = int_to_ptr.vmem [resolvable:$true] %s20
      %23 = dma.hbm_to_vmem [thread:$0]  %s0, 64, %s21, [#allocation3]
    $region5: #{tpu_custom_call.1} parent=1 // pred_fallthru
      _
    // Predicated region
    $region6: #{tpu_custom_call.1} parent=1 // pred_check
      _
    $region7: #{tpu_custom_call.1} parent=1 // pred_check_branch
      %25 = sbr.rel (0) target = $region9
    $region8: #{tpu_custom_call.1} parent=1 // pred_region
      %s27 = ssub.s32 64, 64
      %28 = vsyncadd [#allocation6], %s27
      %s30 = sshll.u32 [#allocation5], 4
      %s31 = int_to_ptr.vmem [resolvable:$true] %s30
      %33 = dma.hbm_to_vmem [thread:$0]  %s1, 64, %s31, [#allocation6]
    $region9: #{tpu_custom_call.1} parent=1 // pred_fallthru
      _
    // Predicated region
    $region10: #{tpu_custom_call.1} parent=1 // pred_check
      _
    $region11: #{tpu_custom_call.1} parent=1 // pred_check_branch
      %35 = sbr.rel (0) target = $region13
    $region12: #{tpu_custom_call.1} parent=1 // pred_region
      %s36 = sadd.s32 0, 0
      %s38 = ssub.s32 512, 512
      %39 = vsyncadd [#allocation6], %s38
      %s40 = smul.addr %s36, 64
      %s41 = scalar_lea.hbm %s2, %s40
      %s42 = sshll.u32 [#allocation7], 4
      %s43 = int_to_ptr.vmem [resolvable:$true] %s42
      %48 = dma.hbm_to_vmem [thread:$0]  %s41, 512, %s43, [#allocation6], 64, 64, 4
    $region13: #{tpu_custom_call.1} parent=1 // pred_fallthru
      _
    // Predicated region
    $region14: #{tpu_custom_call.1} parent=1 // pred_check
      _
    $region15: #{tpu_custom_call.1} parent=1 // pred_check_branch
      %50 = sbr.rel (0) target = $region17
    $region16: #{tpu_custom_call.1} parent=1 // pred_region
      %s51 = sadd.s32 0, 0
      %p52 = scmp.lt.s32.totalorder %s51, 0
      %s53 = scalar_select %p52, %s51, 0
      %s54 = smul.addr %s53, 4
      %s55 = scalar_lea.vmem %s3, %s54
      %s56 = sadd.s32 0, 0
    $region17: #{tpu_custom_call.1} parent=1 // pred_fallthru
      _
    // Predicated region
    $region18: #{tpu_custom_call.1} parent=1 // pred_check
      _
    $region19: #{tpu_custom_call.1} parent=1 // pred_check_branch
      %58 = sbr.rel (0) target = $region21
    $region20: #{tpu_custom_call.1} parent=1 // pred_region
      %s59 = sadd.s32 0, 0
      %s60 = smul.u32 4, %s59
      %s62 = ssub.s32 256, 256
      %63 = vsyncadd [#allocation9], %s62
      %s64 = smul.addr %s60, 64
      %s65 = scalar_lea.hbm %s4, %s64
      %s66 = sshll.u32 [#allocation8], 4
      %s67 = int_to_ptr.vmem [resolvable:$true] %s66
      %72 = dma.hbm_to_vmem [thread:$0]  %s65, 256, %s67, [#allocation9], 64, 64, 4
    $region21: #{tpu_custom_call.1} parent=1 // pred_fallthru
      _
    // Predicated region
    $region22: #{tpu_custom_call.1} parent=1 // pred_check
      _
    $region23: #{tpu_custom_call.1} parent=1 // pred_check_branch
      %74 = sbr.rel (0) target = $region25
    $region24: #{tpu_custom_call.1} parent=1 // pred_region
      %75 = dma.done [#allocation3], 64
    $region25: #{tpu_custom_call.1} parent=1 // pred_fallthru
      _
    // Predicated region
    $region26: #{tpu_custom_call.1} parent=1 // pred_check
      _
    $region27: #{tpu_custom_call.1} parent=1 // pred_check_branch
      %77 = sbr.rel (0) target = $region29
    $region28: #{tpu_custom_call.1} parent=1 // pred_region
      %78 = dma.done [#allocation6], 64
    $region29: #{tpu_custom_call.1} parent=1 // pred_fallthru
      _
    // Predicated region
    $region30: #{tpu_custom_call.1} parent=1 // pred_check
      _
    $region31: #{tpu_custom_call.1} parent=1 // pred_check_branch
      %80 = sbr.rel (0) target = $region33
    $region32: #{tpu_custom_call.1} parent=1 // pred_region
      %81 = dma.done [#allocation6], 512
    $region33: #{tpu_custom_call.1} parent=1 // pred_fallthru
      _
    // Predicated region
    $region34: #{tpu_custom_call.1} parent=1 // pred_check
      _
    $region35: #{tpu_custom_call.1} parent=1 // pred_check_branch
      %83 = sbr.rel (0) target = $region37
    $region36: #{tpu_custom_call.1} parent=1 // pred_region
      %84 = dma.done [#allocation9], 256
    $region37: #{tpu_custom_call.1} parent=1 // pred_fallthru
      _
    %s85 = sadd.s32 0, 0
    %p86 = scmp.lt.s32.totalorder %s85, 0
    %s87 = scalar_select %p86, %s85, 0
    %s88 = smul.addr %s87, 4
    %s89 = scalar_lea.vmem %s3, %s88
    %s90 = sadd.s32 0, 0
    %s91 = sadd.s32 0, 0
    %p92 = scmp.lt.s32.totalorder %s91, 0
    %s93 = scalar_select %p92, %s91, 0
    %s94 = smul.addr %s93, 4
    %s95 = scalar_lea.vmem %s3, %s94
    %s96 = sadd.s32 0, 0
    %s97 = sadd.s32 0, 0
    %s98 = smul.u32 4, %s97
    %p100 = scmp.eq.s32.totalorder 0, 0
    // Predicated region
    $region38: #{tpu_custom_call.1} parent=1 // pred_check
      %p101 = pneg %p100
    $region39: #{tpu_custom_call.1} parent=1 // pred_check_branch
      %103 = sbr.rel (%p101) target = $region41
    $region40: #{tpu_custom_call.1} parent=1 // pred_region
      %vm104 = vcmask 261120
      %105 = vst.msk [vmem:[#allocation10] sm:$0xff] %vm104, 0.0
    $region41: #{tpu_custom_call.1} parent=1 // pred_fallthru
      _
    %v106 = vld [vmem:[%s95] sm:$0x7]
    %v107 = vld [vmem:[#allocation2] sm:$0xf]
    %v108 = vld [vmem:[#allocation7] sm:$0xf]
    %v109 = vld [vmem:[#allocation7 + $0x4] sm:$0xf]
    %v110 = vld [vmem:[#allocation7 + $0x8] sm:$0xf]
    %v111 = vld [vmem:[#allocation7 + $0xc] sm:$0xf]
    %v112 = vld [vmem:[#allocation5] sm:$0xf]
    %s113 = scalar_lea.vmem [#allocation7], 16
    %v114 = vld [vmem:[%s113] sm:$0xf]
    %v115 = vld [vmem:[%s113 + $0x4] sm:$0xf]
    %v116 = vld [vmem:[%s113 + $0x8] sm:$0xf]
    %v117 = vld [vmem:[%s113 + $0xc] sm:$0xf]
    %v122 = vunpack.c.l.b16 %v114
    %v123 = vunpack.c.l.b16 %v115
    %v124 = vunpack.c.l.b16 %v116
    %v125 = vunpack.c.l.b16 %v117
    %v126 = vpack.c.b16 %v123, %v122
    %v127 = vpack.c.b16 %v125, %v124
    %vm130 = vcmask 261120
    %v132 = vsel %vm130, %v112, 0
    %134 = vmatprep.subr.bf16.mxu0 0
    %135 = vmatpush1.bf16.msra.mxu0 %v126
    %136 = vmatprep.subr.bf16.mxu0 0
    %137 = vmatpush1.bf16.msra.mxu0 %v127
    %138 = vmatprep.subr.bf16.mxu0 0
    %139 = vmatpush1.bf16.msra.mxu0 0
    %140 = vmatprep.subr.bf16.mxu0 0
    %141 = vmatpush1.bf16.msra.mxu0 0
    %142 = vmatprep.subr.bf16.mxu0 0
    %143 = vmatpush1.bf16.msra.mxu0 0
    %144 = vmatprep.subr.bf16.mxu0 0
    %145 = vmatpush1.bf16.msra.mxu0 0
    %146 = vmatprep.subr.bf16.mxu0 0
    %147 = vmatpush1.bf16.msra.mxu0 0
    %148 = vmatprep.subr.bf16.mxu0 0
    %149 = vmatpush1.bf16.msra.mxu0 0
    %150 = vmatprep.subr.bf16.mxu0 0
    %151 = vmatpush1.bf16.msra.mxu0 0
    %152 = vmatprep.subr.bf16.mxu0 0
    %153 = vmatpush1.bf16.msra.mxu0 0
    %154 = vmatprep.subr.bf16.mxu0 0
    %155 = vmatpush1.bf16.msra.mxu0 0
    %156 = vmatprep.subr.bf16.mxu0 0
    %157 = vmatpush1.bf16.msra.mxu0 0
    %158 = vmatprep.subr.bf16.mxu0 0
    %159 = vmatpush1.bf16.msra.mxu0 0
    %160 = vmatprep.subr.bf16.mxu0 0
    %161 = vmatpush1.bf16.msra.mxu0 0
    %162 = vmatprep.subr.bf16.mxu0 0
    %163 = vmatpush1.bf16.msra.mxu0 0
    %164 = vmatprep.subr.bf16.mxu0 0
    %165 = vmatpush1.bf16.msra.mxu0 0
    %166 = vmatprep.mubr.bf16.mxu0 0
    %167 = vmatmul.mubr.bf16.gmra.mrb[0].mxu0 %v132
    %v168 = vpop.f32.mrb[0].mxu0
    %v169 = vadd.f32 0.0, %v168
    %v170 = vpop.f32.mrb[0].mxu0
    %v171 = vpop.f32.mrb[0].mxu0
    %v172 = vpop.f32.mrb[0].mxu0
    %173 = vdwg.mxu0
    %v178 = vunpack.c.l.b16 %v108
    %v179 = vunpack.c.l.b16 %v109
    %v180 = vunpack.c.l.b16 %v110
    %v181 = vunpack.c.l.b16 %v111
    %v182 = vpack.c.b16 %v179, %v178
    %v183 = vpack.c.b16 %v181, %v180
    %v187 = vsel %vm130, %v107, 0
    %189 = vmatprep.subr.bf16.mxu0 0
    %190 = vmatpush1.bf16.msra.mxu0 %v182
    %191 = vmatprep.subr.bf16.mxu0 0
    %192 = vmatpush1.bf16.msra.mxu0 %v183
    %193 = vmatprep.subr.bf16.mxu0 0
    %194 = vmatpush1.bf16.msra.mxu0 0
    %195 = vmatprep.subr.bf16.mxu0 0
    %196 = vmatpush1.bf16.msra.mxu0 0
    %197 = vmatprep.subr.bf16.mxu0 0
    %198 = vmatpush1.bf16.msra.mxu0 0
    %199 = vmatprep.subr.bf16.mxu0 0
    %200 = vmatpush1.bf16.msra.mxu0 0
    %201 = vmatprep.subr.bf16.mxu0 0
    %202 = vmatpush1.bf16.msra.mxu0 0
    %203 = vmatprep.subr.bf16.mxu0 0
    %204 = vmatpush1.bf16.msra.mxu0 0
    %205 = vmatprep.subr.bf16.mxu0 0
    %206 = vmatpush1.bf16.msra.mxu0 0
    %207 = vmatprep.subr.bf16.mxu0 0
    %208 = vmatpush1.bf16.msra.mxu0 0
    %209 = vmatprep.subr.bf16.mxu0 0
    %210 = vmatpush1.bf16.msra.mxu0 0
    %211 = vmatprep.subr.bf16.mxu0 0
    %212 = vmatpush1.bf16.msra.mxu0 0
    %213 = vmatprep.subr.bf16.mxu0 0
    %214 = vmatpush1.bf16.msra.mxu0 0
    %215 = vmatprep.subr.bf16.mxu0 0
    %216 = vmatpush1.bf16.msra.mxu0 0
    %217 = vmatprep.subr.bf16.mxu0 0
    %218 = vmatpush1.bf16.msra.mxu0 0
    %219 = vmatprep.subr.bf16.mxu0 0
    %220 = vmatpush1.bf16.msra.mxu0 0
    %221 = vmatprep.mubr.bf16.mxu0 0
    %222 = vmatmul.mubr.bf16.gmra.mrb[0].mxu0 %v187
    %v223 = vpop.f32.mrb[0].mxu0
    %v224 = vadd.f32 %v169, %v223
    %v225 = vpop.f32.mrb[0].mxu0
    %v226 = vpop.f32.mrb[0].mxu0
    %v227 = vpop.f32.mrb[0].mxu0
    %228 = vdwg.mxu0
    %v229 = vlaneseq
    %v230 = vshrl.u32 %v229, 7
    %v231 = vsub.s32 0, %v230
    %v232 = vrot.slane %v106, %v231
    %v233 = vadd.f32 %v224, %v232
    %v234 = vmax.f32 %v233, 0.0
    %v235 = vsel %vm130, %v234, 0.0
    %v236 = vrot.slane %v235, 4
    %v237 = vadd.f32 %v235, %v236
    %v238 = vrot.slane %v237, 2
    %v239 = vadd.f32 %v237, %v238
    %v240 = vrot.slane %v239, 1
    %v241 = vadd.f32 %v239, %v240
    %v242 = vmul.f32 %v241, 0.125
    %v243 = vsub.f32 %v234, %v242
    %v244 = vmul.f32 %v243, %v243
    %v245 = vsel %vm130, %v244, 0.0
    %v246 = vrot.slane %v245, 4
    %v247 = vadd.f32 %v245, %v246
    %v248 = vrot.slane %v247, 2
    %v249 = vadd.f32 %v247, %v248
    %v250 = vrot.slane %v249, 1
    %v251 = vadd.f32 %v249, %v250
    %v252 = vmul.f32 %v251, 0.125
    %v253 = vadd.f32 %v252, 1e-05
    %v254 = vrsqrt.pop %v253
    %v255 = vmul.f32 %v106, %v254
    %v256 = vlaneseq
    %v257 = vshrl.u32 %v256, 7
    %v258 = vsub.s32 1, %v257
    %v259 = vrot.slane %v255, %v258
    %v260 = vmul.f32 %v243, %v259
    %v261 = vlaneseq
    %v262 = vshrl.u32 %v261, 7
    %v263 = vsub.s32 2, %v262
    %v264 = vrot.slane %v106, %v263
    %v265 = vadd.f32 %v260, %v264
    %v266 = vld [vmem:[#allocation10] sm:$0xff]
    %v267 = vpack.c.bf16 %v265, %v265
    %v268 = vld [vmem:[#allocation8] sm:$0xf]
    %v269 = vld [vmem:[#allocation8 + $0x4] sm:$0xf]
    %v270 = vld [vmem:[#allocation8 + $0x8] sm:$0xf]
    %v271 = vld [vmem:[#allocation8 + $0xc] sm:$0xf]
    %v276 = vunpack.c.l.b16 %v268
    %v277 = vunpack.c.l.b16 %v269
    %v278 = vunpack.c.l.b16 %v270
    %v279 = vunpack.c.l.b16 %v271
    %v280 = vpack.c.b16 %v277, %v276
    %v281 = vpack.c.b16 %v279, %v278
    %v285 = vsel %vm130, %v267, 0
    %287 = vmatprep.subr.bf16.mxu0 0
    %288 = vmatpush1.bf16.msra.mxu0 %v280
    %289 = vmatprep.subr.bf16.mxu0 0
    %290 = vmatpush1.bf16.msra.mxu0 %v281
    %291 = vmatprep.subr.bf16.mxu0 0
    %292 = vmatpush1.bf16.msra.mxu0 0
    %293 = vmatprep.subr.bf16.mxu0 0
    %294 = vmatpush1.bf16.msra.mxu0 0
    %295 = vmatprep.subr.bf16.mxu0 0
    %296 = vmatpush1.bf16.msra.mxu0 0
    %297 = vmatprep.subr.bf16.mxu0 0
    %298 = vmatpush1.bf16.msra.mxu0 0
    %299 = vmatprep.subr.bf16.mxu0 0
    %300 = vmatpush1.bf16.msra.mxu0 0
    %301 = vmatprep.subr.bf16.mxu0 0
    %302 = vmatpush1.bf16.msra.mxu0 0
    %303 = vmatprep.subr.bf16.mxu0 0
    %304 = vmatpush1.bf16.msra.mxu0 0
    %305 = vmatprep.subr.bf16.mxu0 0
    %306 = vmatpush1.bf16.msra.mxu0 0
    %307 = vmatprep.subr.bf16.mxu0 0
    %308 = vmatpush1.bf16.msra.mxu0 0
    %309 = vmatprep.subr.bf16.mxu0 0
    %310 = vmatpush1.bf16.msra.mxu0 0
    %311 = vmatprep.subr.bf16.mxu0 0
    %312 = vmatpush1.bf16.msra.mxu0 0
    %313 = vmatprep.subr.bf16.mxu0 0
    %314 = vmatpush1.bf16.msra.mxu0 0
    %315 = vmatprep.subr.bf16.mxu0 0
    %316 = vmatpush1.bf16.msra.mxu0 0
    %317 = vmatprep.subr.bf16.mxu0 0
    %318 = vmatpush1.bf16.msra.mxu0 0
    %319 = vmatprep.mubr.bf16.mxu0 0
    %320 = vmatmul.mubr.bf16.gmra.mrb[0].mxu0 %v285
    %v321 = vpop.f32.mrb[0].mxu0
    %v322 = vadd.f32 0.0, %v321
    %v323 = vpop.f32.mrb[0].mxu0
    %v324 = vpop.f32.mrb[0].mxu0
    %v325 = vpop.f32.mrb[0].mxu0
    %326 = vdwg.mxu0
    %v327 = vadd.f32 %v266, %v322
    %328 = vst.msk [vmem:[#allocation10] sm:$0xff] %vm130, %v327
    // Predicated region
    $region42: #{tpu_custom_call.1} parent=1 // pred_check
      _
    $region43: #{tpu_custom_call.1} parent=1 // pred_check_branch
      %330 = sbr.rel (0) target = $region45
    $region44: #{tpu_custom_call.1} parent=1 // pred_region
      %s332 = ssub.s32 128, 128
      %333 = vsyncadd [#allocation4], %s332
      %s335 = sshll.u32 [#allocation10], 4
      %s336 = int_to_ptr.vmem [resolvable:$true] %s335
      %338 = dma.vmem_to_hbm [thread:$0]  %s336, 128, %s5, [#allocation4]
    $region45: #{tpu_custom_call.1} parent=1 // pred_fallthru
      _
    // Predicated region
    $region46: #{tpu_custom_call.1} parent=1 // pred_check
      _
    $region47: #{tpu_custom_call.1} parent=1 // pred_check_branch
      %340 = sbr.rel (0) target = $region49
    $region48: #{tpu_custom_call.1} parent=1 // pred_region
      %341 = dma.done [#allocation4], 128
    $region49: #{tpu_custom_call.1} parent=1 // pred_fallthru
      _
    %342 = vsyncpa [#allocation3], 1
    %343 = vsyncpa [#allocation6], 1
    %344 = vsyncpa [#allocation9], 1
    %345 = vsyncpa [#allocation4], 1

</llo_original>
